<compile_context>
chip_gen: v5e
topology: v5e:2x2
jax: 0.10.0
libtpu: 0.0.40
codegen_flags: <defaults>
</compile_context>

<pallas_src>
import functools

import jax
import jax.numpy as jnp
from jax.experimental import pallas as pl
from jax.experimental.pallas import tpu as pltpu


# Below this many input bytes a standalone kernel launch costs more than the
# whole computation; let XLA handle it inline.
_SMALL_PROBLEM_BYTES = 1 << 20


def _dual_head_kernel(x_ref, w_ref, b_ref, o_ref):
    # x_ref: (TILE_M, D) activation tile            (streamed from HBM)
    # w_ref: (D, 2)      fused weights [w_e | w_c]  (VMEM resident)
    # b_ref: (1, 2)      fused bias                 (VMEM resident)
    # o_ref: (TILE_M, 2) fused output (col 0 = pred_e, col 1 = pred_c)
    y = jnp.dot(x_ref[...], w_ref[...], preferred_element_type=jnp.float32)
    o_ref[...] = (y + b_ref[...]).astype(o_ref.dtype)


@functools.lru_cache(maxsize=1)
def _device_tiling_params():
    """(per-tile activation byte budget, scoped-VMEM limit) for this chip."""
    try:
        kind = jax.devices()[0].device_kind.lower()
    except Exception:  # defensive: fall back to the conservative default
        kind = ""
    if "v7" in kind:
        # v7x: 64 MiB physical VMEM per TensorCore -> tighter budget.
        return 12 * 1024 * 1024, 44 * 1024 * 1024
    # v5e / v6e: 128 MiB physical VMEM; the default scoped limit is only
    # 16/32 MiB, so the explicit vmem_limit_bytes is what unlocks big tiles.
    return 16 * 1024 * 1024, 56 * 1024 * 1024


def _round_up(x, m):
    return ((x + m - 1) // m) * m


def _pick_tile_m(M, D, itemsize, budget_bytes):
    """Largest row-tile that fits the byte budget (no artificial row cap)."""
    row_bytes = max(1, D * itemsize)
    t = budget_bytes // row_bytes
    if t >= 128:
        t = (t // 128) * 128          # keep lane/sublane tiling clean
    else:
        t = max(8, (t // 8) * 8)      # huge-D guard: never exceed the budget
    return M if M <= t else t


def fuse_classification_params(w_e, b_e, w_c, b_c):
    """Fuse the two nn.Linear(feat_dim, 1) heads once, outside the hot path.

    w_e, w_c: (1, D) (PyTorch nn.Linear weight layout); b_e, b_c: (1,).
    Returns w_fused_t (D, 2) — pre-transposed so the kernel matmul is the
    standard (M, K) @ (K, N) orientation — and b_fused (1, 2).
    """
    w_fused_t = jnp.concatenate([w_e, w_c], axis=0).T            # (D, 2)
    b_fused = jnp.concatenate([b_e, b_c], axis=0).reshape(1, 2)  # (1, 2)
    return w_fused_t, b_fused


@functools.partial(jax.jit, static_argnames=("min_pallas_bytes",))
def classification_forward_fused(doc_sents_h, w_fused_t, b_fused,
                                 *, min_pallas_bytes=_SMALL_PROBLEM_BYTES):
    """doc_sents_h: (B, S, D); w_fused_t: (D, 2); b_fused: (1, 2).
    Returns (pred_e, pred_c), each (B, S)."""
    B, S, D = doc_sents_h.shape
    M = B * S
    x2 = doc_sents_h.reshape(M, D)
    itemsize = jnp.dtype(doc_sents_h.dtype).itemsize

    if M * D * itemsize < min_pallas_bytes:
        # Tiny-problem fallback: plain XLA fuses this into neighbouring ops.
        y = (jnp.dot(x2, w_fused_t, preferred_element_type=jnp.float32)
             + b_fused).astype(doc_sents_h.dtype)
    else:
        budget_bytes, vmem_cap = _device_tiling_params()
        tile_m = _pick_tile_m(M, D, itemsize, budget_bytes)

        # Force >= 2 grid steps when there is enough work so the "parallel"
        # M axis can be sharded across v7x's two TensorCores (the one extra
        # ~0.35 us grid step is noise on single-TC v5e/v6e).
        if tile_m >= M and M > 128:
            half = _round_up(pl.cdiv(M, 2), 128)
            if half < M:
                tile_m = half

        grid = (pl.cdiv(M, tile_m),)

        tile_bytes = tile_m * D * itemsize
        # Double-buffered activation stream must fit the scoped VMEM limit.
        vmem_limit = max(vmem_cap, 2 * tile_bytes + (8 << 20))

        cost = pl.CostEstimate(
            flops=2 * M * D * 2,  # two fused heads
            bytes_accessed=(M * D + 2 * D + 2 * M + 2) * itemsize,
            transcendentals=0,
        )

        y = pl.pallas_call(
            _dual_head_kernel,
            out_shape=jax.ShapeDtypeStruct((M, 2), doc_sents_h.dtype),
            grid=grid,
            in_specs=[
                pl.BlockSpec((tile_m, D), lambda i: (i, 0)),  # activations (tiled over M)
                pl.BlockSpec((D, 2), lambda i: (0, 0)),       # fused weights (resident)
                pl.BlockSpec((1, 2), lambda i: (0, 0)),       # fused bias (resident)
            ],
            out_specs=pl.BlockSpec((tile_m, 2), lambda i: (i, 0)),
            compiler_params=pltpu.CompilerParams(
                dimension_semantics=("parallel",),  # shard M across v7x's 2 TCs
                vmem_limit_bytes=vmem_limit,
            ),
            cost_estimate=cost,
        )(x2, w_fused_t, b_fused)

    pred_e = y[:, 0].reshape(B, S)
    pred_c = y[:, 1].reshape(B, S)
    return pred_e, pred_c


def classification_forward(doc_sents_h, w_e, b_e, w_c, b_c):
    """Convenience wrapper taking raw PyTorch-layout params.  Prefer fusing the
    params once with `fuse_classification_params` and calling the fused entry
    point when invoking repeatedly."""
    w_fused_t, b_fused = fuse_classification_params(w_e, b_e, w_c, b_c)
    return classification_forward_fused(doc_sents_h, w_fused_t, b_fused)


if __name__ == "__main__":
    def _run_case(key, B, S, D, force_pallas):
        kx, kwe, kbe, kwc, kbc = jax.random.split(key, 5)
        x = jax.random.normal(kx, (B, S, D), dtype=jnp.float32)

        # Deterministic parameter init (nn.Linear(feat_dim, 1) shapes).
        bound = 1.0 / jnp.sqrt(jnp.float32(D))
        w_e = jax.random.uniform(kwe, (1, D), minval=-bound, maxval=bound, dtype=jnp.float32)
        b_e = jax.random.uniform(kbe, (1,), minval=-bound, maxval=bound, dtype=jnp.float32)
        w_c = jax.random.uniform(kwc, (1, D), minval=-bound, maxval=bound, dtype=jnp.float32)
        b_c = jax.random.uniform(kbc, (1,), minval=-bound, maxval=bound, dtype=jnp.float32)

        # Fuse the head params once (hoisted out of the per-call path), run.
        w_fused_t, b_fused = fuse_classification_params(w_e, b_e, w_c, b_c)
        min_bytes = 0 if force_pallas else _SMALL_PROBLEM_BYTES
        pred_e, pred_c = classification_forward_fused(
            x, w_fused_t, b_fused, min_pallas_bytes=min_bytes)
        jax.block_until_ready((pred_e, pred_c))

        # Pure-JAX reference mirroring the PyTorch module exactly.
        ref_e = (jnp.einsum("bsd,od->bso", x, w_e) + b_e)[..., 0]
        ref_c = (jnp.einsum("bsd,od->bso", x, w_c) + b_c)[..., 0]
        assert pred_e.shape == (B, S) and pred_c.shape == (B, S)
        assert jnp.allclose(pred_e, ref_e, atol=1e-4, rtol=1e-5)
        assert jnp.allclose(pred_c, ref_c, atol=1e-4, rtol=1e-5)

    key = jax.random.PRNGKey(0)
    k1, k2 = jax.random.split(key)

    # 1) Module-sized small shapes; force the Pallas path (single-tile grid).
    _run_case(k1, B=2, S=8, D=32, force_pallas=True)
    # 2) Multi-tile grid with a partial last tile (exercises masked writeback
    #    and the >=2-step parallel grid used for v7x megacore).
    _run_case(k2, B=4, S=250, D=256, force_pallas=True)

    print("KERNEL_OK")
</pallas_src>

<mosaic_0001>
module attributes {stable_mosaic.version = 11 : i64} {
  func.func @_dual_head_kernel(%arg0: i32, %arg1: memref<16x32xf32, #tpu.memory_space<vmem>>, %arg2: memref<32x2xf32, #tpu.memory_space<vmem>>, %arg3: memref<1x2xf32, #tpu.memory_space<vmem>>, %arg4: memref<16x2xf32, #tpu.memory_space<vmem>>) attributes {dimension_semantics = [#tpu.dimension_semantics<parallel>], iteration_bounds = array<i64: 1>, scalar_prefetch = 0 : i64, scratch_operands = 0 : i64, tpu.core_type = #tpu.core_type<tc>, window_params = [{transform_indices = @transform_0, window_bounds = array<i64: 16, 32>}, {pipeline_mode = #tpu.pipeline_mode<synchronous>, transform_indices = @transform_1, window_bounds = array<i64: 32, 2>}, {pipeline_mode = #tpu.pipeline_mode<synchronous>, transform_indices = @transform_2, window_bounds = array<i64: 1, 2>}, {transform_indices = @transform_3, window_bounds = array<i64: 16, 2>}]} {
    %c0 = arith.constant 0 : index
    %c0_0 = arith.constant 0 : index
    %0 = vector.load %arg1[%c0, %c0_0] : memref<16x32xf32, #tpu.memory_space<vmem>>, vector<16x32xf32>
    %c0_1 = arith.constant 0 : index
    %c0_2 = arith.constant 0 : index
    %1 = vector.load %arg2[%c0_1, %c0_2] : memref<32x2xf32, #tpu.memory_space<vmem>>, vector<32x2xf32>
    %cst = arith.constant dense<0.000000e+00> : vector<16x2xf32>
    %2 = tpu.matmul %0, %1, %cst {dimension_numbers = #tpu.dot_dimension_numbers<[1], [0], [0], [1], [0, 0, 1, 1], [], []>} : vector<16x32xf32>, vector<32x2xf32>, vector<16x2xf32> -> vector<16x2xf32>
    %c0_3 = arith.constant 0 : index
    %c0_4 = arith.constant 0 : index
    %3 = vector.load %arg3[%c0_3, %c0_4] : memref<1x2xf32, #tpu.memory_space<vmem>>, vector<1x2xf32>
    %4 = vector.broadcast %3 : vector<1x2xf32> to vector<16x2xf32>
    %5 = arith.addf %2, %4 : vector<16x2xf32>
    %c0_5 = arith.constant 0 : index
    %c0_6 = arith.constant 0 : index
    %6 = vector.load %arg4[%c0_5, %c0_6] : memref<16x2xf32, #tpu.memory_space<vmem>>, vector<16x2xf32>
    tpu.vector_store %arg4[%c0_5, %c0_6], %5 {strides = array<i32>} : memref<16x2xf32, #tpu.memory_space<vmem>>, vector<16x2xf32>,
    return
  }
  func.func @transform_0(%arg0: i32) -> (i32, i32) {
    %c0_i32 = arith.constant 0 : i32
    %c0_i32_0 = arith.constant 0 : i32
    return %arg0, %c0_i32 : i32, i32
  }
  func.func @transform_1(%arg0: i32) -> (i32, i32) {
    %c0_i32 = arith.constant 0 : i32
    %c0_i32_0 = arith.constant 0 : i32
    %c0_i32_1 = arith.constant 0 : i32
    return %c0_i32, %c0_i32_0 : i32, i32
  }
  func.func @transform_2(%arg0: i32) -> (i32, i32) {
    %c0_i32 = arith.constant 0 : i32
    %c0_i32_0 = arith.constant 0 : i32
    %c0_i32_1 = arith.constant 0 : i32
    return %c0_i32, %c0_i32_0 : i32, i32
  }
  func.func @transform_3(%arg0: i32) -> (i32, i32) {
    %c0_i32 = arith.constant 0 : i32
    %c0_i32_0 = arith.constant 0 : i32
    return %arg0, %c0_i32 : i32, i32
  }
}

</mosaic_0001>

<llo_original>
// kernel: squeeze.3
$region0: #{squeeze.3}
  %s0 = inlined_call_operand.vmem [shape: f32[16], index: 0, kind: input, shape index: {}]
  %s1 = inlined_call_operand.hbm [shape: f32[2,8], index: 1, kind: output, shape index: {}]
  $region1: #{squeeze.3} parent=0
    #allocation0 [shape = 'u8[1024]{0}', space=vmem, size = 0x400, scoped, tag = 'operand span for operand 1']
    #allocation1 [shape = 's32[1]{0}', space=sflag, size = 0x4, scoped, tag = 'scoped memory for squeeze.3']
    #allocation2 [shape = 'u8[4096]{0}', space=vmem, size = 0x1000, scoped, tag = 'scoped mem for output reshape']
    #allocation3 [shape = 'u8[4096]{0}', space=vmem, size = 0x1000, scoped, tag = 'scoped mem for input reshape']
    %2 = vsyncpa [#allocation1], 0
    %s4 = ssub.s32 2, 1
    %v5 = vld [vmem:[%s0] sm:%s4]
    %6 = vst [vmem:[#allocation3] sm:%s4] %v5
    %v7 = vld [vmem:[#allocation3] sm:$0x1]
    %vm8 = vcmask 64512
    %9 = vst.msk [vmem:[#allocation2] sm:$0x1] %vm8, %v7
    %v10 = vld [vmem:[#allocation3] sm:$0x1]
    %11 = vrot.lane.b32.xlu0 %v10, 120
    %v12 = vpop.permute.xlu0 %11
    %vm13 = vcmask 64512
    %s14 = scalar_lea.vmem [#allocation2], 1
    %15 = vst.msk [vmem:[%s14] sm:$0x1] %vm13, %v12
    %s17 = ssub.s32 4, 1
    %v18 = vld [vmem:[#allocation2] sm:%s17]
    %s20 = ssub.s32 4, 1
    %21 = vst [vmem:[#allocation0] sm:%s20] %v18
    %23 = vsyncadd [#allocation1], 0
    %s25 = sshll.u32 [#allocation0], 4
    %s26 = int_to_ptr.vmem [resolvable:$true] %s25
    %s27 = sshll.u32 %s1, 4
    %s28 = int_to_ptr.hbm [resolvable:$true] %s27
    %30 = dma.vmem_to_hbm [thread:$0]  %s26, 32, %s28, [#allocation1]
    %32 = dma.done [#allocation1], 32
    %33 = vsyncpa [#allocation1], 1

// kernel: classification_forward_fused.1
$region0: #{classification_forward_fused.1}
  #allocation0 [shape = 'u32[]', space=smem, size = 0x4, offset = 0x4, fixed_abs, tag = 'smem constant byte address 0x4 - core index']
  #allocation1 [shape = 'u32[72,128]{1,0:T(1,128)}', space=vmem, size = 0x9000, scoped, tag = 'internal scratch']
  %s0 = inlined_call_operand.vmem [shape: f32[16,32], index: 0, kind: input, shape index: {}]
  %s1 = inlined_call_operand.vmem [shape: f32[32,2], index: 1, kind: input, shape index: {}]
  %s2 = inlined_call_operand.vmem [shape: f32[1,2], index: 2, kind: input, shape index: {}]
  %s3 = inlined_call_operand.vmem [shape: f32[16,2], index: 3, kind: output, shape index: {}]
  %s4 = sld [smem:[#allocation0]]
  $region22: #{classification_forward_fused.1} parent=0
    _
  %s6 = ssub.s32 1, %s4
  %s7 = scalar_select 0, %s6, %s4
  // Predicated region
  $region2: #{classification_forward_fused.1} parent=0 // pred_check
    _
  $region3: #{classification_forward_fused.1} parent=0 // pred_check_branch
    %9 = sbr.rel (0) target = $region5
  $region4: #{classification_forward_fused.1} parent=0 // pred_region
    _
  $region5: #{classification_forward_fused.1} parent=0 // pred_fallthru
    _
  // Predicated region
  $region6: #{classification_forward_fused.1} parent=0 // pred_check
    _
  $region7: #{classification_forward_fused.1} parent=0 // pred_check_branch
    %11 = sbr.rel (0) target = $region9
  $region8: #{classification_forward_fused.1} parent=0 // pred_region
    _
  $region9: #{classification_forward_fused.1} parent=0 // pred_fallthru
    _
  // Predicated region
  $region10: #{classification_forward_fused.1} parent=0 // pred_check
    _
  $region11: #{classification_forward_fused.1} parent=0 // pred_check_branch
    %13 = sbr.rel (0) target = $region13
  $region12: #{classification_forward_fused.1} parent=0 // pred_region
    _
  $region13: #{classification_forward_fused.1} parent=0 // pred_fallthru
    _
  %v14 = vld [vmem:[%s0] sm:$0xff]
  %v15 = vld [vmem:[%s0 + $0x8] sm:$0xff]
  %v16 = vld [vmem:[%s1] sm:$0xff]
  %v17 = vld [vmem:[%s1 + $0x8] sm:$0xff]
  %v18 = vld [vmem:[%s1 + $0x10] sm:$0xff]
  %v19 = vld [vmem:[%s1 + $0x18] sm:$0xff]
  %v20 = vld [vmem:[%s2] sm:$0x1]
  %v22 = vperm.slane %v20, 0
  %vm24 = vcmask 261120
  %v26 = vsel %vm24, %v14, 0
  %v29 = vsel %vm24, %v15, 0
  %31 = vmatpush.msra.mxu0 0.0
  %32 = vmatpush.msra.mxu0 0.0
  %33 = vmatpush.msra.mxu0 0.0
  %34 = vmatpush.msra.mxu0 0.0
  %35 = vmatpush.msra.mxu0 0.0
  %36 = vmatpush.msra.mxu0 0.0
  %37 = vmatpush.msra.mxu0 0.0
  %38 = vmatpush.msra.mxu0 0.0
  %39 = vmatpush.msra.mxu0 0.0
  %40 = vmatpush.msra.mxu0 0.0
  %41 = vmatpush.msra.mxu0 0.0
  %42 = vmatpush.msra.mxu0 0.0
  %43 = vmatpush.msra.mxu0 %v19
  %44 = vmatpush.msra.mxu0 %v18
  %45 = vmatpush.msra.mxu0 %v17
  %46 = vmatpush.msra.mxu0 %v16
  %47 = vmatmul.f32.gmra.mxu0 %v26
  %v48 = vpop.f32.mrf.mxu0
  %v49 = vadd.f32 %v22, %v48
  %50 = vmatmul.f32.gmra.mxu0 %v29
  %v51 = vpop.f32.mrf.mxu0
  %v52 = vadd.f32 %v22, %v51
  %53 = vdwg.mxu0
  %vm54 = vcmask 15360
  %55 = vst.msk [vmem:[%s3] sm:$0xff] %vm54, %v49
  %56 = vst.msk [vmem:[%s3 + $0x8] sm:$0xff] %vm54, %v52
  // Predicated region
  $region14: #{classification_forward_fused.1} parent=0 // pred_check
    _
  $region15: #{classification_forward_fused.1} parent=0 // pred_check_branch
    %58 = sbr.rel (0) target = $region17
  $region16: #{classification_forward_fused.1} parent=0 // pred_region
    _
  $region17: #{classification_forward_fused.1} parent=0 // pred_fallthru
    _
  // Predicated region
  $region18: #{classification_forward_fused.1} parent=0 // pred_check
    _
  $region19: #{classification_forward_fused.1} parent=0 // pred_check_branch
    %60 = sbr.rel (0) target = $region21
  $region20: #{classification_forward_fused.1} parent=0 // pred_region
    _
  $region21: #{classification_forward_fused.1} parent=0 // pred_fallthru
    _

</llo_original>
